<compile_context>
chip_gen: v7x
topology: tpu7x:2x2x1
jax: 0.10.0
libtpu: 0.0.40
codegen_flags: <defaults>
</compile_context>

<pallas_src>
import jax
import jax.numpy as jnp
from jax.experimental import pallas as pl
from jax.experimental.pallas import tpu as pltpu

LANES = 128
MAX_TILE_ROWS = 2048   # (2048,128) f32 block = 1 MiB/input/buffer; 2 in x 2 buf = 4 MiB
CHUNK_ROWS = 256       # in-kernel sub-slab (bounds live ranges / intermediates)


def _round_up(x, m):
    return ((x + m - 1) // m) * m


def _sublane_pack(dtype):
    # f32 -> 8 rows, bf16/f16 -> 16, int8/fp8 -> 32 (native packed-tile height).
    return 8 * max(1, 4 // jnp.dtype(dtype).itemsize)


def _tensorcores_per_chip():
    """Best-effort TensorCore count for one chip (2 on v7x, 1 on v5e/v6e).

    Conservative: defaults to 1 so single-TC chips never pay for a split axis.
    """
    try:
        info = pltpu.get_tpu_info()
        for name in ("num_cores", "core_count", "tensorcores_per_chip",
                     "num_tensorcores"):
            v = getattr(info, name, None)
            if isinstance(v, int) and v >= 1:
                return max(1, min(int(v), 2))
    except Exception:
        pass
    try:
        kind = jax.devices()[0].device_kind.lower()
        if "v7" in kind:
            return 2
    except Exception:
        pass
    return 1


def _make_kernel(tile_rows, chunk_rows, rows, tiles_per_split, needs_row_mask):
    num_chunks = tile_rows // chunk_rows

    def kernel(pred_ref, gt_ref, sum_ref, cnt_ref):
        c = pl.program_id(0)   # split (TensorCore) axis
        i = pl.program_id(1)   # reduction axis within the split

        # Output blocks are resident across the "arbitrary" axis: init once.
        @pl.when(i == 0)
        def _():
            sum_ref[...] = jnp.zeros((8, LANES), jnp.float32)
            cnt_ref[...] = jnp.zeros((8, LANES), jnp.float32)

        tile_row0 = (c * tiles_per_split + i) * tile_rows

        def accumulate(err, mask):
            msum = jnp.where(mask, err, 0.0)
            mcnt = mask.astype(jnp.float32)
            # Pure-VPU partial reduce; reshape matches native (8,128) tiling.
            sum_ref[...] += msum.reshape(chunk_rows // 8, 8, LANES).sum(axis=0)
            cnt_ref[...] += mcnt.reshape(chunk_rows // 8, 8, LANES).sum(axis=0)

        def process_chunk(s):
            r0 = s * chunk_rows
            if not isinstance(r0, int):
                r0 = pl.multiple_of(r0, chunk_rows)
            p = pred_ref[pl.ds(r0, chunk_rows), :].astype(jnp.float32)
            g = gt_ref[pl.ds(r0, chunk_rows), :].astype(jnp.float32)
            p = jnp.maximum(p, 0.0)                       # clamp(min=0)
            # |log(a) - log(b)| == |log(a/b)|: one log instead of two.
            err = jnp.abs(jnp.log((p + 1e-6) / (g + 1e-6)))
            base = g > 0.0   # lane padding has gt == 0 -> already excluded

            if needs_row_mask:
                chunk_row0 = tile_row0 + s * chunk_rows
                fully_valid = (chunk_row0 + chunk_rows) <= rows

                @pl.when(fully_valid)
                def _():
                    accumulate(err, base)

                @pl.when(jnp.logical_not(fully_valid))
                def _():
                    # Ragged tail / clamped duplicate tiles: mask rows >= rows.
                    local = jax.lax.broadcasted_iota(
                        jnp.int32, (chunk_rows, LANES), 0)
                    valid = (local + chunk_row0) < rows
                    accumulate(err, base & valid)
            else:
                accumulate(err, base)

        if num_chunks == 1:
            process_chunk(0)
        else:
            def body(s, carry):
                process_chunk(s)
                return carry
            jax.lax.fori_loop(0, num_chunks, body, 0, unroll=True)

    return kernel


def mae_log_loss(prediction, gt, *, max_tile_rows=MAX_TILE_ROWS, num_splits=None):
    pred_flat = prediction.reshape(-1)
    gt_flat = gt.reshape(-1)
    n = pred_flat.shape[0]

    # Pad only to the native sublane tile (<= pack*128 - 1 elements; usually a
    # no-op).  pred pads with 1.0 (finite log), gt pads with 0.0 (masked).
    pack = max(_sublane_pack(pred_flat.dtype), _sublane_pack(gt_flat.dtype))
    padded = _round_up(n, pack * LANES)
    if padded != n:
        pred_flat = jnp.pad(pred_flat, (0, padded - n), constant_values=1.0)
        gt_flat = jnp.pad(gt_flat, (0, padded - n), constant_values=0.0)

    rows = padded // LANES
    pred2d = pred_flat.reshape(rows, LANES)   # lane-dense slab (free reshape)
    gt2d = gt_flat.reshape(rows, LANES)

    # tile_rows: either the full (padded) row count, or MAX_TILE_ROWS (a
    # multiple of 32, so it satisfies the packed-tile constraint for any dtype).
    tile_rows = min(max_tile_rows, rows)
    if tile_rows > CHUNK_ROWS and tile_rows % CHUNK_ROWS == 0:
        chunk_rows = CHUNK_ROWS
    else:
        chunk_rows = tile_rows

    total_tiles = pl.cdiv(rows, tile_rows)

    detected_tc = _tensorcores_per_chip()
    if num_splits is None:
        num_splits = detected_tc
    splits = max(1, min(num_splits, total_tiles))
    tiles_per_split = pl.cdiv(total_tiles, splits)

    # Row-validity masking only needed if the grid over-covers the padded rows
    # (ragged last tile and/or clamped duplicate tiles).
    needs_row_mask = (splits * tiles_per_split * tile_rows) != rows

    def in_index(c, i):
        t = c * tiles_per_split + i
        # Clamp duplicate tiles from the rounded-up split; their rows are fully
        # masked in-kernel so the data content does not matter.
        return (jnp.minimum(t, total_tiles - 1), 0)

    kernel = _make_kernel(tile_rows, chunk_rows, rows, tiles_per_split,
                          needs_row_mask)

    # CORE_PARALLEL only when we truly have >1 TensorCore to shard across
    # (v7x); otherwise keep the (possibly forced-for-test) split axis serial.
    if splits > 1 and splits <= detected_tc:
        split_sem = pltpu.CORE_PARALLEL
    else:
        split_sem = pltpu.ARBITRARY

    sum_part, cnt_part = pl.pallas_call(
        kernel,
        out_shape=(
            jax.ShapeDtypeStruct((splits, 8, LANES), jnp.float32),
            jax.ShapeDtypeStruct((splits, 8, LANES), jnp.float32),
        ),
        grid_spec=pltpu.PrefetchScalarGridSpec(
            num_scalar_prefetch=0,
            grid=(splits, tiles_per_split),
            in_specs=[
                pl.BlockSpec((tile_rows, LANES), in_index),
                pl.BlockSpec((tile_rows, LANES), in_index),
            ],
            out_specs=[
                pl.BlockSpec((None, 8, LANES), lambda c, i: (c, 0, 0)),
                pl.BlockSpec((None, 8, LANES), lambda c, i: (c, 0, 0)),
            ],
        ),
        compiler_params=pltpu.CompilerParams(
            dimension_semantics=(split_sem, pltpu.ARBITRARY),
        ),
    )(pred2d, gt2d)

    total_sum = jnp.sum(sum_part)
    total_cnt = jnp.sum(cnt_part)
    # 0 valid pixels -> NaN, matching torch.mean over an empty selection.
    return (total_sum / total_cnt).astype(jnp.float32)


def _reference(pred, gt):
    # Matches the PyTorch module literally (two logs) to validate the
    # single-log rewrite inside the kernel.
    p = jnp.maximum(pred.astype(jnp.float32), 0.0)
    g = gt.astype(jnp.float32)
    err = jnp.abs(jnp.log(p + 1e-6) - jnp.log(g + 1e-6))
    m = g > 0
    return jnp.sum(jnp.where(m, err, 0.0)) / jnp.sum(m)


if __name__ == "__main__":
    key = jax.random.PRNGKey(0)
    k1, k2, k3, k4, k5, k6 = jax.random.split(key, 6)

    # Primary check: small NCHW depth-map-like shapes (batch=2, channels=1, 16x16).
    pred = jax.random.uniform(k1, (2, 1, 16, 16), jnp.float32, minval=-0.2, maxval=5.0)
    gt = jax.random.uniform(k2, (2, 1, 16, 16), jnp.float32, minval=-1.0, maxval=5.0)
    gt = jnp.where(gt > 0, gt, 0.0)  # mix of valid (>0) and invalid (==0) pixels

    loss = mae_log_loss(pred, gt)
    jax.block_until_ready(loss)
    ref = _reference(pred, gt)
    assert jnp.allclose(loss, ref, rtol=1e-5, atol=1e-5), (loss, ref)

    # Ragged size + forced small tile + forced 2-way split: exercises the
    # multi-tile path, the lane padding, the clamped/masked duplicate tile and
    # the pl.when row-mask branches (split stays serial on single-TC chips).
    pred2 = jax.random.uniform(k3, (2, 1, 40, 127), jnp.float32, minval=-0.2, maxval=5.0)
    gt2 = jax.random.uniform(k4, (2, 1, 40, 127), jnp.float32, minval=-1.0, maxval=5.0)
    gt2 = jnp.where(gt2 > 0, gt2, 0.0)

    loss2 = mae_log_loss(pred2, gt2, max_tile_rows=16, num_splits=2)
    jax.block_until_ready(loss2)
    ref2 = _reference(pred2, gt2)
    assert jnp.allclose(loss2, ref2, rtol=1e-5, atol=1e-5), (loss2, ref2)

    # Larger shape that exercises the unrolled in-kernel chunk loop
    # (rows = 768 -> 3 sub-slabs of 256 rows, single grid tile).
    pred3 = jax.random.uniform(k5, (2, 4, 96, 128), jnp.float32, minval=-0.2, maxval=5.0)
    gt3 = jax.random.uniform(k6, (2, 4, 96, 128), jnp.float32, minval=-1.0, maxval=5.0)
    gt3 = jnp.where(gt3 > 0, gt3, 0.0)

    loss3 = mae_log_loss(pred3, gt3)
    jax.block_until_ready(loss3)
    ref3 = _reference(pred3, gt3)
    assert jnp.allclose(loss3, ref3, rtol=1e-5, atol=1e-5), (loss3, ref3)

    print("KERNEL_OK")
</pallas_src>

<mosaic_0001>
module attributes {stable_mosaic.version = 11 : i64} {
  func.func @kernel(%arg0: i32, %arg1: i32, %arg2: memref<8x128xf32, #tpu.memory_space<vmem>>, %arg3: memref<8x128xf32, #tpu.memory_space<vmem>>, %arg4: memref<1x8x128xf32, #tpu.memory_space<vmem>>, %arg5: memref<1x8x128xf32, #tpu.memory_space<vmem>>) attributes {dimension_semantics = [#tpu.dimension_semantics<arbitrary>, #tpu.dimension_semantics<arbitrary>], iteration_bounds = array<i64: 1, 1>, scalar_prefetch = 0 : i64, scratch_operands = 0 : i64, tpu.core_type = #tpu.core_type<tc>, window_params = [{transform_indices = @transform_0, window_bounds = array<i64: 8, 128>}, {transform_indices = @transform_1, window_bounds = array<i64: 8, 128>}, {transform_indices = @transform_2, window_bounds = array<i64: 1, 8, 128>}, {transform_indices = @transform_3, window_bounds = array<i64: 1, 8, 128>}]} {
    %c0_i32 = arith.constant 0 : i32
    %0 = arith.cmpi eq, %arg1, %c0_i32 : i32
    %1 = arith.extui %0 : i1 to i32
    %c0_i32_0 = arith.constant 0 : i32
    %2 = arith.cmpi ne, %1, %c0_i32_0 : i32
    scf.if %2 {
      %cst_22 = arith.constant 0.000000e+00 : f32
      %36 = vector.broadcast %cst_22 : f32 to vector<8x128xf32>
      %c0_23 = arith.constant 0 : index
      %c0_24 = arith.constant 0 : index
      %c0_25 = arith.constant 0 : index
      %37 = vector.load %arg4[%c0_23, %c0_24, %c0_25] : memref<1x8x128xf32, #tpu.memory_space<vmem>>, vector<1x8x128xf32>
      %38 = vector.shape_cast %37 : vector<1x8x128xf32> to vector<8x128xf32>
      %39 = vector.shape_cast %36 : vector<8x128xf32> to vector<1x8x128xf32>
      tpu.vector_store %arg4[%c0_23, %c0_24, %c0_25], %39 {strides = array<i32>} : memref<1x8x128xf32, #tpu.memory_space<vmem>>, vector<1x8x128xf32>,
      %cst_26 = arith.constant 0.000000e+00 : f32
      %40 = vector.broadcast %cst_26 : f32 to vector<8x128xf32>
      %c0_27 = arith.constant 0 : index
      %c0_28 = arith.constant 0 : index
      %c0_29 = arith.constant 0 : index
      %41 = vector.load %arg5[%c0_27, %c0_28, %c0_29] : memref<1x8x128xf32, #tpu.memory_space<vmem>>, vector<1x8x128xf32>
      %42 = vector.shape_cast %41 : vector<1x8x128xf32> to vector<8x128xf32>
      %43 = vector.shape_cast %40 : vector<8x128xf32> to vector<1x8x128xf32>
      tpu.vector_store %arg5[%c0_27, %c0_28, %c0_29], %43 {strides = array<i32>} : memref<1x8x128xf32, #tpu.memory_space<vmem>>, vector<1x8x128xf32>,
    } else {
    }
    %c0 = arith.constant 0 : index
    %c0_1 = arith.constant 0 : index
    %3 = vector.load %arg2[%c0, %c0_1] : memref<8x128xf32, #tpu.memory_space<vmem>>, vector<8x128xf32>
    %c0_2 = arith.constant 0 : index
    %c0_3 = arith.constant 0 : index
    %4 = vector.load %arg3[%c0_2, %c0_3] : memref<8x128xf32, #tpu.memory_space<vmem>>, vector<8x128xf32>
    %cst = arith.constant 0.000000e+00 : f32
    %5 = vector.broadcast %cst : f32 to vector<8x128xf32>
    %6 = arith.maximumf %3, %5 : vector<8x128xf32>
    %cst_4 = arith.constant 9.99999997E-7 : f32
    %7 = vector.broadcast %cst_4 : f32 to vector<8x128xf32>
    %8 = arith.addf %6, %7 : vector<8x128xf32>
    %cst_5 = arith.constant 9.99999997E-7 : f32
    %9 = vector.broadcast %cst_5 : f32 to vector<8x128xf32>
    %10 = arith.addf %4, %9 : vector<8x128xf32>
    %11 = arith.divf %8, %10 : vector<8x128xf32>
    %12 = math.log %11 : vector<8x128xf32>
    %13 = math.absf %12 : vector<8x128xf32>
    %cst_6 = arith.constant 0.000000e+00 : f32
    %14 = vector.broadcast %cst_6 : f32 to vector<8x128xf32>
    %15 = arith.cmpf ogt, %4, %14 : vector<8x128xf32>
    %cst_7 = arith.constant 0.000000e+00 : f32
    %16 = vector.broadcast %cst_7 : f32 to vector<8x128xf32>
    %17 = arith.select %15, %13, %16 : vector<8x128xi1>, vector<8x128xf32>
    %18 = arith.extui %15 : vector<8x128xi1> to vector<8x128xi32>
    %19 = arith.sitofp %18 : vector<8x128xi32> to vector<8x128xf32>
    %c0_8 = arith.constant 0 : index
    %c0_9 = arith.constant 0 : index
    %c0_10 = arith.constant 0 : index
    %20 = vector.load %arg4[%c0_8, %c0_9, %c0_10] : memref<1x8x128xf32, #tpu.memory_space<vmem>>, vector<1x8x128xf32>
    %21 = vector.shape_cast %20 : vector<1x8x128xf32> to vector<8x128xf32>
    %22 = vector.shape_cast %17 : vector<8x128xf32> to vector<1x8x128xf32>
    %cst_11 = arith.constant dense<0.000000e+00> : vector<8x128xf32>
    %23 = vector.multi_reduction <add>, %22, %cst_11 [0] : vector<1x8x128xf32> to vector<8x128xf32>
    %24 = arith.addf %21, %23 : vector<8x128xf32>
    %c0_12 = arith.constant 0 : index
    %c0_13 = arith.constant 0 : index
    %c0_14 = arith.constant 0 : index
    %25 = vector.load %arg4[%c0_12, %c0_13, %c0_14] : memref<1x8x128xf32, #tpu.memory_space<vmem>>, vector<1x8x128xf32>
    %26 = vector.shape_cast %25 : vector<1x8x128xf32> to vector<8x128xf32>
    %27 = vector.shape_cast %24 : vector<8x128xf32> to vector<1x8x128xf32>
    tpu.vector_store %arg4[%c0_12, %c0_13, %c0_14], %27 {strides = array<i32>} : memref<1x8x128xf32, #tpu.memory_space<vmem>>, vector<1x8x128xf32>,
    %c0_15 = arith.constant 0 : index
    %c0_16 = arith.constant 0 : index
    %c0_17 = arith.constant 0 : index
    %28 = vector.load %arg5[%c0_15, %c0_16, %c0_17] : memref<1x8x128xf32, #tpu.memory_space<vmem>>, vector<1x8x128xf32>
    %29 = vector.shape_cast %28 : vector<1x8x128xf32> to vector<8x128xf32>
    %30 = vector.shape_cast %19 : vector<8x128xf32> to vector<1x8x128xf32>
    %cst_18 = arith.constant dense<0.000000e+00> : vector<8x128xf32>
    %31 = vector.multi_reduction <add>, %30, %cst_18 [0] : vector<1x8x128xf32> to vector<8x128xf32>
    %32 = arith.addf %29, %31 : vector<8x128xf32>
    %c0_19 = arith.constant 0 : index
    %c0_20 = arith.constant 0 : index
    %c0_21 = arith.constant 0 : index
    %33 = vector.load %arg5[%c0_19, %c0_20, %c0_21] : memref<1x8x128xf32, #tpu.memory_space<vmem>>, vector<1x8x128xf32>
    %34 = vector.shape_cast %33 : vector<1x8x128xf32> to vector<8x128xf32>
    %35 = vector.shape_cast %32 : vector<8x128xf32> to vector<1x8x128xf32>
    tpu.vector_store %arg5[%c0_19, %c0_20, %c0_21], %35 {strides = array<i32>} : memref<1x8x128xf32, #tpu.memory_space<vmem>>, vector<1x8x128xf32>,
    return
  }
  func.func @transform_0(%arg0: i32, %arg1: i32) -> (i32, i32) {
    %c1_i32 = arith.constant 1 : i32
    %0 = arith.muli %arg0, %c1_i32 : i32
    %1 = arith.addi %0, %arg1 : i32
    %c0_i32 = arith.constant 0 : i32
    %2 = arith.minsi %1, %c0_i32 : i32
    %c0_i32_0 = arith.constant 0 : i32
    %c0_i32_1 = arith.constant 0 : i32
    return %2, %c0_i32_0 : i32, i32
  }
  func.func @transform_1(%arg0: i32, %arg1: i32) -> (i32, i32) {
    %c1_i32 = arith.constant 1 : i32
    %0 = arith.muli %arg0, %c1_i32 : i32
    %1 = arith.addi %0, %arg1 : i32
    %c0_i32 = arith.constant 0 : i32
    %2 = arith.minsi %1, %c0_i32 : i32
    %c0_i32_0 = arith.constant 0 : i32
    %c0_i32_1 = arith.constant 0 : i32
    return %2, %c0_i32_0 : i32, i32
  }
  func.func @transform_2(%arg0: i32, %arg1: i32) -> (i32, i32, i32) {
    %c0_i32 = arith.constant 0 : i32
    %c0_i32_0 = arith.constant 0 : i32
    %c0_i32_1 = arith.constant 0 : i32
    return %arg0, %c0_i32, %c0_i32_0 : i32, i32, i32
  }
  func.func @transform_3(%arg0: i32, %arg1: i32) -> (i32, i32, i32) {
    %c0_i32 = arith.constant 0 : i32
    %c0_i32_0 = arith.constant 0 : i32
    %c0_i32_1 = arith.constant 0 : i32
    return %arg0, %c0_i32, %c0_i32_0 : i32, i32, i32
  }
}

</mosaic_0001>

<llo_original>
// kernel: tpu_custom_call.1
$region0: #{tpu_custom_call.1}
  #allocation0 [shape = 'u32[]', space=smem, size = 0x4, offset = 0x4, fixed_abs, tag = 'smem constant byte address 0x4 - core index']
  #allocation1 [shape = 'u32[144,128]{1,0:T(1,128)}', space=vmem, size = 0x12000, scoped, tag = 'internal scratch']
  %s0 = inlined_call_operand.hbm [shape: f32[8,128], index: 0, kind: input, shape index: {}]
  %s1 = inlined_call_operand.hbm [shape: f32[8,128], index: 1, kind: input, shape index: {}]
  %s2 = inlined_call_operand.hbm [shape: f32[1,8,128], index: 2, kind: output, shape index: {0}]
  %s3 = inlined_call_operand.hbm [shape: f32[1,8,128], index: 3, kind: output, shape index: {1}]
  %4 = xla_tuple %s2, %s3
  %s5 = sld [smem:[#allocation0]]
  $region38: #{tpu_custom_call.1} parent=0
    _
  %s7 = ssub.s32 1, %s5
  %s8 = scalar_select 0, %s7, %s5
  $region1: #{tpu_custom_call.1} parent=0
    #allocation2 [shape = 'u8[4096]{0}', space=vmem, size = 0x1000, scoped, tag = 'input window, operand 0, single buffered']
    #allocation3 [shape = 's32[1]{0}', space=sflag, size = 0x4, scoped, tag = 'scoped memory for tpu_custom_call.1']
    #allocation4 [shape = 's32[1]{0}', space=sflag, size = 0x4, scoped, tag = 'scoped memory for tpu_custom_call.1']
    #allocation5 [shape = 'u8[4096]{0}', space=vmem, size = 0x1000, scoped, tag = 'input window, operand 1, single buffered']
    #allocation6 [shape = 's32[1]{0}', space=sflag, size = 0x4, scoped, tag = 'scoped memory for tpu_custom_call.1']
    #allocation7 [shape = 'u8[4096]{0}', space=vmem, size = 0x1000, scoped, tag = 'output window, operand 0, single buffered']
    #allocation8 [shape = 'u8[4096]{0}', space=vmem, size = 0x1000, scoped, tag = 'output window, operand 1, single buffered']
    #allocation9 [shape = 's32[1]{0}', space=sflag, size = 0x4, scoped, tag = 'scoped memory for tpu_custom_call.1']
    %9 = vsyncpa [#allocation3], 0
    %10 = vsyncpa [#allocation6], 0
    %11 = vsyncpa [#allocation4], 0
    %12 = vsyncpa [#allocation9], 0
    // Predicated region
    $region2: #{tpu_custom_call.1} parent=1 // pred_check
      _
    $region3: #{tpu_custom_call.1} parent=1 // pred_check_branch
      %14 = sbr.rel (0) target = $region5
    $region4: #{tpu_custom_call.1} parent=1 // pred_region
      %s15 = sadd.s32 0, 0
      %p16 = scmp.lt.s32.totalorder %s15, 0
      %s17 = scalar_select %p16, %s15, 0
      %s19 = ssub.s32 128, 128
      %20 = vsyncadd [#allocation3], %s19
      %s21 = smul.addr %s17, 128
      %s22 = scalar_lea.hbm %s0, %s21
      %s24 = sshll.u32 [#allocation2], 4
      %s25 = int_to_ptr.vmem [resolvable:$true] %s24
      %27 = dma.hbm_to_vmem [thread:$0]  %s22, 128, %s25, [#allocation3]
    $region5: #{tpu_custom_call.1} parent=1 // pred_fallthru
      _
    // Predicated region
    $region6: #{tpu_custom_call.1} parent=1 // pred_check
      _
    $region7: #{tpu_custom_call.1} parent=1 // pred_check_branch
      %29 = sbr.rel (0) target = $region9
    $region8: #{tpu_custom_call.1} parent=1 // pred_region
      %s30 = sadd.s32 0, 0
      %p31 = scmp.lt.s32.totalorder %s30, 0
      %s32 = scalar_select %p31, %s30, 0
      %s34 = ssub.s32 128, 128
      %35 = vsyncadd [#allocation6], %s34
      %s36 = smul.addr %s32, 128
      %s37 = scalar_lea.hbm %s1, %s36
      %s39 = sshll.u32 [#allocation5], 4
      %s40 = int_to_ptr.vmem [resolvable:$true] %s39
      %42 = dma.hbm_to_vmem [thread:$0]  %s37, 128, %s40, [#allocation6]
    $region9: #{tpu_custom_call.1} parent=1 // pred_fallthru
      _
    // Predicated region
    $region10: #{tpu_custom_call.1} parent=1 // pred_check
      _
    $region11: #{tpu_custom_call.1} parent=1 // pred_check_branch
      %44 = sbr.rel (0) target = $region13
    $region12: #{tpu_custom_call.1} parent=1 // pred_region
      %45 = dma.done [#allocation3], 128
    $region13: #{tpu_custom_call.1} parent=1 // pred_fallthru
      _
    // Predicated region
    $region14: #{tpu_custom_call.1} parent=1 // pred_check
      _
    $region15: #{tpu_custom_call.1} parent=1 // pred_check_branch
      %47 = sbr.rel (0) target = $region17
    $region16: #{tpu_custom_call.1} parent=1 // pred_region
      %48 = dma.done [#allocation6], 128
    $region17: #{tpu_custom_call.1} parent=1 // pred_fallthru
      _
    %s49 = sadd.s32 0, 0
    %p50 = scmp.lt.s32.totalorder %s49, 0
    %s51 = scalar_select %p50, %s49, 0
    %s52 = sadd.s32 0, 0
    %p53 = scmp.lt.s32.totalorder %s52, 0
    %s54 = scalar_select %p53, %s52, 0
    %p55 = scmp.eq.s32.totalorder 0, 0
    // Predicated region
    $region18: #{tpu_custom_call.1} parent=1 // pred_check
      %p56 = pneg %p55
    $region19: #{tpu_custom_call.1} parent=1 // pred_check_branch
      %58 = sbr.rel (%p56) target = $region21
    $region20: #{tpu_custom_call.1} parent=1 // pred_region
      %59 = vst [vmem:[#allocation7] sm:$0xff] 0.0
      %60 = vst [vmem:[#allocation8] sm:$0xff] 0.0
    $region21: #{tpu_custom_call.1} parent=1 // pred_fallthru
      _
    %v61 = vld [vmem:[#allocation2] sm:$0xff]
    %v62 = vld [vmem:[#allocation5] sm:$0xff]
    %v63 = vmax.f32 %v61, 0.0
    %v64 = vadd.f32 %v63, 1e-06
    %v65 = vadd.f32 %v62, 1e-06
    %v66 = vrcp.pop %v65
    %v67 = vmul.f32 %v64, %v66
    %v68 = vlog2.pop %v67
    %v69 = vmul.f32 %v68, 0.6931472
    %v70 = vand.u32 2147483647, %v69
    %vm71 = vcmp.gt.f32.partialorder %v62, 0.0
    %v72 = vsel %vm71, %v70, 0.0
    %v73 = vsel %vm71, 1, 0
    %v74 = vcvt.s32.f32 %v73
    %v75 = vld [vmem:[#allocation7] sm:$0xff]
    %v76 = vadd.f32 %v72, 0.0
    %v77 = vadd.f32 %v75, %v76
    %78 = vst [vmem:[#allocation7] sm:$0xff] %v77
    %v79 = vld [vmem:[#allocation8] sm:$0xff]
    %v80 = vadd.f32 %v74, 0.0
    %v81 = vadd.f32 %v79, %v80
    %82 = vst [vmem:[#allocation8] sm:$0xff] %v81
    // Predicated region
    $region22: #{tpu_custom_call.1} parent=1 // pred_check
      _
    $region23: #{tpu_custom_call.1} parent=1 // pred_check_branch
      %84 = sbr.rel (0) target = $region25
    $region24: #{tpu_custom_call.1} parent=1 // pred_region
      %s86 = ssub.s32 128, 128
      %87 = vsyncadd [#allocation4], %s86
      %s89 = sshll.u32 [#allocation7], 4
      %s90 = int_to_ptr.vmem [resolvable:$true] %s89
      %92 = dma.vmem_to_hbm [thread:$0]  %s90, 128, %s2, [#allocation4]
    $region25: #{tpu_custom_call.1} parent=1 // pred_fallthru
      _
    // Predicated region
    $region26: #{tpu_custom_call.1} parent=1 // pred_check
      _
    $region27: #{tpu_custom_call.1} parent=1 // pred_check_branch
      %94 = sbr.rel (0) target = $region29
    $region28: #{tpu_custom_call.1} parent=1 // pred_region
      %s96 = ssub.s32 128, 128
      %97 = vsyncadd [#allocation9], %s96
      %s99 = sshll.u32 [#allocation8], 4
      %s100 = int_to_ptr.vmem [resolvable:$true] %s99
      %102 = dma.vmem_to_hbm [thread:$0]  %s100, 128, %s3, [#allocation9]
    $region29: #{tpu_custom_call.1} parent=1 // pred_fallthru
      _
    // Predicated region
    $region30: #{tpu_custom_call.1} parent=1 // pred_check
      _
    $region31: #{tpu_custom_call.1} parent=1 // pred_check_branch
      %104 = sbr.rel (0) target = $region33
    $region32: #{tpu_custom_call.1} parent=1 // pred_region
      %105 = dma.done [#allocation4], 128
    $region33: #{tpu_custom_call.1} parent=1 // pred_fallthru
      _
    // Predicated region
    $region34: #{tpu_custom_call.1} parent=1 // pred_check
      _
    $region35: #{tpu_custom_call.1} parent=1 // pred_check_branch
      %107 = sbr.rel (0) target = $region37
    $region36: #{tpu_custom_call.1} parent=1 // pred_region
      %108 = dma.done [#allocation9], 128
    $region37: #{tpu_custom_call.1} parent=1 // pred_fallthru
      _
    %109 = vsyncpa [#allocation3], 1
    %110 = vsyncpa [#allocation6], 1
    %111 = vsyncpa [#allocation4], 1
    %112 = vsyncpa [#allocation9], 1

</llo_original>
